<compile_context>
chip_gen: v7x
topology: tpu7x:2x2x1
jax: 0.10.0
libtpu: 0.0.40
codegen_flags: <defaults>
</compile_context>

<pallas_src>
import functools

import jax
import jax.numpy as jnp
from jax import lax
from jax.experimental import pallas as pl
from jax.experimental.pallas import tpu as pltpu


def _round_up(x, m):
    return ((x + m - 1) // m) * m


# ----------------------------- Kernel 1: router ------------------------------
def _router_kernel(x_ref, w1_ref, b1_ref, w2_ref, b2p_ref,
                   probs_ref, topv_ref, topi_ref, *, num_experts, top_k):
    # x_ref:  [TM, H]  bf16
    # w1_ref: [H, H]   bf16     b1_ref:  [1, H]  f32
    # w2_ref: [H, Ep]  bf16     b2p_ref: [1, Ep] f32  (bias + mask penalty; pads = -1e9)
    # probs_ref: [TM, Ep] f32   topv_ref: [TM, K] f32   topi_ref: [TM, K] i32
    h = jnp.dot(x_ref[...], w1_ref[...], preferred_element_type=jnp.float32)
    h = jnp.maximum(h + b1_ref[...], 0.0)                       # ReLU in f32
    logits = jnp.dot(h.astype(jnp.bfloat16), w2_ref[...],
                     preferred_element_type=jnp.float32) + b2p_ref[...]

    # numerically stable softmax over the (padded) expert lanes
    m = jnp.max(logits, axis=-1, keepdims=True)
    e = jnp.exp(logits - m)
    denom = jnp.sum(e, axis=-1, keepdims=True)
    probs = e * pl.reciprocal(denom, approx=True)               # divide on the EUP
    probs_ref[...] = probs

    # fused top-k over expert lanes (K is a tiny static constant -> unrolled)
    e_pad = probs.shape[-1]
    lane = lax.broadcasted_iota(jnp.int32, probs.shape, 1)
    work = jnp.where(lane < num_experts, probs, -1.0)           # pad lanes never win
    for k in range(top_k):
        vmax = jnp.max(work, axis=-1, keepdims=True)
        idx = jnp.min(jnp.where(work == vmax, lane, e_pad),
                      axis=-1, keepdims=True)                   # first-occurrence tie-break
        topv_ref[:, k:k + 1] = vmax
        topi_ref[:, k:k + 1] = idx
        work = jnp.where(lane == idx, -1.0, work)


def router_probs_pallas(x_bf, w1_bf, b1, w2_bf, b2pen, *, num_experts, top_k, tm):
    n_pad, hidden = x_bf.shape
    e_pad = w2_bf.shape[1]
    grid = (n_pad // tm,)
    kernel = functools.partial(_router_kernel, num_experts=num_experts, top_k=top_k)
    # TODO(synk): for very large H on v7x (64 MiB VMEM) add a K-tiling grid axis
    # over the H->H contraction with a f32 accumulator scratch (pl.when init/final).
    return pl.pallas_call(
        kernel,
        out_shape=(
            jax.ShapeDtypeStruct((n_pad, e_pad), jnp.float32),
            jax.ShapeDtypeStruct((n_pad, top_k), jnp.float32),
            jax.ShapeDtypeStruct((n_pad, top_k), jnp.int32),
        ),
        grid=grid,
        in_specs=[
            pl.BlockSpec((tm, hidden), lambda i: (i, 0)),        # x tile (pipelined)
            pl.BlockSpec((hidden, hidden), lambda i: (0, 0)),    # w1 (resident)
            pl.BlockSpec((1, hidden), lambda i: (0, 0)),         # b1 (resident)
            pl.BlockSpec((hidden, e_pad), lambda i: (0, 0)),     # w2 padded (resident)
            pl.BlockSpec((1, e_pad), lambda i: (0, 0)),          # bias + penalty (resident)
        ],
        out_specs=(
            pl.BlockSpec((tm, e_pad), lambda i: (i, 0)),         # lane-dense probs
            pl.BlockSpec((tm, top_k), lambda i: (i, 0)),
            pl.BlockSpec((tm, top_k), lambda i: (i, 0)),
        ),
        compiler_params=pltpu.CompilerParams(
            dimension_semantics=("parallel",),
            vmem_limit_bytes=48 * 1024 * 1024,   # bump scoped VMEM (default 16/32 MiB)
        ),
    )(x_bf, w1_bf, b1, w2_bf, b2pen)


# ----------------- Kernel 2: dense dispatch / combine build ------------------
def _dispatch_kernel(eidx_ref, cpos_ref, prob_ref, valid_ref,
                     disp_ref, comb_ref, *, top_k, capacity):
    tm, ec = disp_ref.shape
    col = lax.broadcasted_iota(jnp.int32, (tm, ec), 1)
    disp = jnp.zeros((tm, ec), jnp.float32)
    comb = jnp.zeros((tm, ec), jnp.float32)
    for k in range(top_k):
        tgt = eidx_ref[:, k:k + 1] * capacity + cpos_ref[:, k:k + 1]   # [TM, 1]
        hit = (col == tgt) & (valid_ref[:, k:k + 1] > 0)
        hitf = hit.astype(jnp.float32)
        disp = disp + hitf
        comb = comb + hitf * prob_ref[:, k:k + 1]
    disp_ref[...] = disp
    comb_ref[...] = comb


def dispatch_combine_pallas(e_all, c_all, p_all, v_all, *, num_experts, capacity, tm):
    n_pad, top_k = e_all.shape
    ec = num_experts * capacity
    grid = (n_pad // tm,)
    kernel = functools.partial(_dispatch_kernel, top_k=top_k, capacity=capacity)
    tok_spec = pl.BlockSpec((tm, top_k), lambda i: (i, 0))
    out_spec = pl.BlockSpec((tm, ec), lambda i: (i, 0))
    return pl.pallas_call(
        kernel,
        out_shape=(jax.ShapeDtypeStruct((n_pad, ec), jnp.float32),
                   jax.ShapeDtypeStruct((n_pad, ec), jnp.float32)),
        grid=grid,
        in_specs=[tok_spec, tok_spec, tok_spec, tok_spec],
        out_specs=(out_spec, out_spec),
        compiler_params=pltpu.CompilerParams(
            dimension_semantics=("parallel",),
            vmem_limit_bytes=48 * 1024 * 1024,
        ),
    )(e_all, c_all, p_all, v_all)


# ------------------------------- forward -------------------------------------
@functools.partial(jax.jit, static_argnames=("num_experts", "top_k", "capacity"))
def base_router_forward(hidden_states, params, expert_mask, *, num_experts,
                        top_k, capacity):
    B, S, H = hidden_states.shape
    N = B * S
    E = num_experts
    E_pad = _round_up(E, 128)

    # token tile ~512 rows (good HBM pipelining on v5e/v6e/v7x); tiny demo shapes
    # collapse to a single grid step.
    tm = min(512, _round_up(N, 8))
    n_pad = _round_up(N, tm)

    # --- kernel-1 operands: bf16 matmul inputs, f32 fused bias+penalty --------
    x_bf = hidden_states.reshape(N, H).astype(jnp.bfloat16)
    if n_pad != N:
        x_bf = jnp.pad(x_bf, ((0, n_pad - N), (0, 0)))
    w1_bf = params["w1"].astype(jnp.bfloat16)                          # [H, H] (in, out)
    b1 = params["b1"].reshape(1, H).astype(jnp.float32)
    w2_bf = jnp.zeros((H, E_pad), jnp.bfloat16).at[:, :E].set(
        params["w2"].astype(jnp.bfloat16))                             # [H, Ep]
    penalty = (1.0 - expert_mask.astype(jnp.float32)) * (-1e9)
    b2pen = jnp.full((E_pad,), -1e9, jnp.float32).at[:E].set(
        params["b2"].astype(jnp.float32) + penalty).reshape(1, E_pad)

    # --- kernel 1: router MLP + softmax + fused top-k -------------------------
    probs_pad, topv_pad, topi_pad = router_probs_pallas(
        x_bf, w1_bf, b1, w2_bf, b2pen, num_experts=E, top_k=top_k, tm=tm)
    router_probs = probs_pad[:N, :E].reshape(B, S, E)

    # --- top-k renormalization (torch: divide by sum of selected probs) ------
    top_k_probs = topv_pad / jnp.sum(topv_pad, axis=-1, keepdims=True)  # [n_pad, K]
    top_k_indices = topi_pad                                            # [n_pad, K]

    # --- fairscale capacity-slot assignment (tiny [n_pad,E]/[E] arrays) ------
    # TODO(synk): this sequential, data-dependent expert_count update stays in
    # plain JAX; it is faithful to PyTorch's non-accumulating index_put
    # (count grows by at most 1 per slot; colliding tokens share a slot).
    token_valid = jnp.arange(n_pad) < N
    e_iota = jnp.arange(E)
    expert_count = jnp.zeros((E,), jnp.int32)
    e_cols, c_cols, v_cols = [], [], []
    for k in range(top_k):                     # top_k is a tiny static constant
        e_k = top_k_indices[:, k]
        cnt = expert_count[e_k]
        valid = (cnt < capacity) & token_valid
        e_cols.append(e_k)
        c_cols.append(cnt)
        v_cols.append(valid)
        appears = jnp.any((e_k[:, None] == e_iota[None, :]) & valid[:, None], axis=0)
        expert_count = expert_count + appears.astype(jnp.int32)
    e_all = jnp.stack(e_cols, axis=1).astype(jnp.int32)
    c_all = jnp.stack(c_cols, axis=1).astype(jnp.int32)
    v_all = jnp.stack(v_cols, axis=1).astype(jnp.int32)
    p_all = top_k_probs.astype(jnp.float32)

    # --- kernel 2: dense dispatch / combine in one store-bound pass ----------
    disp_flat, comb_flat = dispatch_combine_pallas(
        e_all, c_all, p_all, v_all, num_experts=E, capacity=capacity, tm=tm)
    dispatch = disp_flat[:N].reshape(B, S, E, capacity)
    combine = comb_flat[:N].reshape(B, S, E, capacity)

    # --- aux loss -------------------------------------------------------------
    router_prob_per_expert = jnp.mean(router_probs, axis=(0, 1))        # [E]
    aux_loss = jnp.sum(router_prob_per_expert *
                       jnp.log(router_prob_per_expert * E + 1e-9))
    return dispatch, combine, router_probs, aux_loss


# ------------------------------- demo / main ----------------------------------
if __name__ == "__main__":
    B, S, H = 2, 8, 32
    num_experts = 8
    top_k = 2
    capacity_factor = 1.5
    capacity = int(B * S * capacity_factor * top_k / num_experts)       # = 6

    key = jax.random.PRNGKey(0)
    k_x, k_w1, k_b1, k_w2, k_b2 = jax.random.split(key, 5)

    # Deterministic synthetic init; weights stored [in, out] (transposed vs
    # torch.nn.Linear) so the kernel computes plain x @ W + b.
    scale1 = 1.0 / jnp.sqrt(jnp.float32(H))
    params = {
        "w1": jax.random.uniform(k_w1, (H, H), jnp.float32, -scale1, scale1),
        "b1": jax.random.uniform(k_b1, (H,), jnp.float32, -scale1, scale1),
        "w2": jax.random.uniform(k_w2, (H, num_experts), jnp.float32, -scale1, scale1),
        "b2": jax.random.uniform(k_b2, (num_experts,), jnp.float32, -scale1, scale1),
    }
    hidden_states = jax.random.normal(k_x, (B, S, H), jnp.float32)
    expert_mask = jnp.ones((num_experts,), jnp.float32)                 # all available

    dispatch, combine, router_probs, aux_loss = base_router_forward(
        hidden_states, params, expert_mask,
        num_experts=num_experts, top_k=top_k, capacity=capacity)
    jax.block_until_ready((dispatch, combine, router_probs, aux_loss))

    # Light sanity checks.
    assert dispatch.shape == (B, S, num_experts, capacity)
    assert combine.shape == (B, S, num_experts, capacity)
    assert router_probs.shape == (B, S, num_experts)
    # bf16 matmul operands + approx reciprocal => slightly loose tolerance
    assert jnp.allclose(jnp.sum(router_probs, axis=-1), 1.0, atol=5e-3)
    # each token is dispatched to at most top_k (expert, slot) positions
    assert jnp.all(jnp.sum(dispatch, axis=(2, 3)) <= top_k + 1e-6)

    print("KERNEL_OK")
</pallas_src>

<mosaic_0001>
module attributes {stable_mosaic.version = 11 : i64} {
  func.func @_router_kernel(%arg0: i32, %arg1: memref<16x32xbf16, #tpu.memory_space<vmem>>, %arg2: memref<32x32xbf16, #tpu.memory_space<vmem>>, %arg3: memref<1x32xf32, #tpu.memory_space<vmem>>, %arg4: memref<32x128xbf16, #tpu.memory_space<vmem>>, %arg5: memref<1x128xf32, #tpu.memory_space<vmem>>, %arg6: memref<16x128xf32, #tpu.memory_space<vmem>>, %arg7: memref<16x2xf32, #tpu.memory_space<vmem>>, %arg8: memref<16x2xi32, #tpu.memory_space<vmem>>) attributes {dimension_semantics = [#tpu.dimension_semantics<parallel>], iteration_bounds = array<i64: 1>, scalar_prefetch = 0 : i64, scratch_operands = 0 : i64, tpu.core_type = #tpu.core_type<tc>, window_params = [{transform_indices = @transform_0, window_bounds = array<i64: 16, 32>}, {pipeline_mode = #tpu.pipeline_mode<synchronous>, transform_indices = @transform_1, window_bounds = array<i64: 32, 32>}, {pipeline_mode = #tpu.pipeline_mode<synchronous>, transform_indices = @transform_2, window_bounds = array<i64: 1, 32>}, {pipeline_mode = #tpu.pipeline_mode<synchronous>, transform_indices = @transform_3, window_bounds = array<i64: 32, 128>}, {pipeline_mode = #tpu.pipeline_mode<synchronous>, transform_indices = @transform_4, window_bounds = array<i64: 1, 128>}, {transform_indices = @transform_5, window_bounds = array<i64: 16, 128>}, {transform_indices = @transform_6, window_bounds = array<i64: 16, 2>}, {transform_indices = @transform_7, window_bounds = array<i64: 16, 2>}]} {
    %c0 = arith.constant 0 : index
    %c0_0 = arith.constant 0 : index
    %0 = vector.load %arg1[%c0, %c0_0] : memref<16x32xbf16, #tpu.memory_space<vmem>>, vector<16x32xbf16>
    %c0_1 = arith.constant 0 : index
    %c0_2 = arith.constant 0 : index
    %1 = vector.load %arg2[%c0_1, %c0_2] : memref<32x32xbf16, #tpu.memory_space<vmem>>, vector<32x32xbf16>
    %cst = arith.constant dense<0.000000e+00> : vector<16x32xf32>
    %2 = tpu.matmul %0, %1, %cst {dimension_numbers = #tpu.dot_dimension_numbers<[1], [0], [0], [1], [0, 0, 1, 1], [], []>} : vector<16x32xbf16>, vector<32x32xbf16>, vector<16x32xf32> -> vector<16x32xf32>
    %c0_3 = arith.constant 0 : index
    %c0_4 = arith.constant 0 : index
    %3 = vector.load %arg3[%c0_3, %c0_4] : memref<1x32xf32, #tpu.memory_space<vmem>>, vector<1x32xf32>
    %4 = vector.broadcast %3 : vector<1x32xf32> to vector<16x32xf32>
    %5 = arith.addf %2, %4 : vector<16x32xf32>
    %cst_5 = arith.constant 0.000000e+00 : f32
    %6 = vector.broadcast %cst_5 : f32 to vector<16x32xf32>
    %7 = arith.maximumf %5, %6 : vector<16x32xf32>
    %8 = arith.truncf %7 : vector<16x32xf32> to vector<16x32xbf16>
    %c0_6 = arith.constant 0 : index
    %c0_7 = arith.constant 0 : index
    %9 = vector.load %arg4[%c0_6, %c0_7] : memref<32x128xbf16, #tpu.memory_space<vmem>>, vector<32x128xbf16>
    %cst_8 = arith.constant dense<0.000000e+00> : vector<16x128xf32>
    %10 = tpu.matmul %8, %9, %cst_8 {dimension_numbers = #tpu.dot_dimension_numbers<[1], [0], [0], [1], [0, 0, 1, 1], [], []>} : vector<16x32xbf16>, vector<32x128xbf16>, vector<16x128xf32> -> vector<16x128xf32>
    %c0_9 = arith.constant 0 : index
    %c0_10 = arith.constant 0 : index
    %11 = vector.load %arg5[%c0_9, %c0_10] : memref<1x128xf32, #tpu.memory_space<vmem>>, vector<1x128xf32>
    %12 = vector.broadcast %11 : vector<1x128xf32> to vector<16x128xf32>
    %13 = arith.addf %10, %12 : vector<16x128xf32>
    %cst_11 = arith.constant dense<0xFF800000> : vector<16xf32>
    %14 = vector.multi_reduction <maximumf>, %13, %cst_11 [1] : vector<16x128xf32> to vector<16xf32>
    %15 = vector.shape_cast %14 : vector<16xf32> to vector<16x1xf32>
    %16 = vector.broadcast %15 : vector<16x1xf32> to vector<16x128xf32>
    %17 = arith.subf %13, %16 : vector<16x128xf32>
    %18 = math.exp %17 : vector<16x128xf32>
    %cst_12 = arith.constant dense<0.000000e+00> : vector<16xf32>
    %19 = vector.multi_reduction <add>, %18, %cst_12 [1] : vector<16x128xf32> to vector<16xf32>
    %20 = vector.shape_cast %19 : vector<16xf32> to vector<16x1xf32>
    %21 = tpu.reciprocal %20 {approx = true} : vector<16x1xf32> -> vector<16x1xf32>
    %22 = vector.broadcast %21 : vector<16x1xf32> to vector<16x128xf32>
    %23 = arith.mulf %18, %22 : vector<16x128xf32>
    %c0_13 = arith.constant 0 : index
    %c0_14 = arith.constant 0 : index
    %24 = vector.load %arg6[%c0_13, %c0_14] : memref<16x128xf32, #tpu.memory_space<vmem>>, vector<16x128xf32>
    tpu.vector_store %arg6[%c0_13, %c0_14], %23 {strides = array<i32>} : memref<16x128xf32, #tpu.memory_space<vmem>>, vector<16x128xf32>,
    %25 = tpu.iota {dimensions = array<i32: 1>} : vector<16x128xi32>
    %c8_i32 = arith.constant 8 : i32
    %26 = vector.broadcast %c8_i32 : i32 to vector<16x128xi32>
    %27 = arith.cmpi slt, %25, %26 : vector<16x128xi32>
    %cst_15 = arith.constant -1.000000e+00 : f32
    %28 = vector.broadcast %cst_15 : f32 to vector<16x128xf32>
    %29 = arith.select %27, %23, %28 : vector<16x128xi1>, vector<16x128xf32>
    %cst_16 = arith.constant dense<0xFF800000> : vector<16xf32>
    %30 = vector.multi_reduction <maximumf>, %29, %cst_16 [1] : vector<16x128xf32> to vector<16xf32>
    %31 = vector.shape_cast %30 : vector<16xf32> to vector<16x1xf32>
    %32 = vector.broadcast %31 : vector<16x1xf32> to vector<16x128xf32>
    %33 = arith.cmpf oeq, %29, %32 : vector<16x128xf32>
    %c128_i32 = arith.constant 128 : i32
    %34 = vector.broadcast %c128_i32 : i32 to vector<16x128xi32>
    %35 = arith.select %33, %25, %34 : vector<16x128xi1>, vector<16x128xi32>
    %cst_17 = arith.constant dense<2147483647> : vector<16xi32>
    %36 = vector.multi_reduction <minsi>, %35, %cst_17 [1] : vector<16x128xi32> to vector<16xi32>
    %37 = vector.shape_cast %36 : vector<16xi32> to vector<16x1xi32>
    %c0_18 = arith.constant 0 : index
    %c0_19 = arith.constant 0 : index
    %38 = vector.load %arg7[%c0_18, %c0_19] : memref<16x2xf32, #tpu.memory_space<vmem>>, vector<16x1xf32>
    tpu.vector_store %arg7[%c0_18, %c0_19], %31 {strides = array<i32>} : memref<16x2xf32, #tpu.memory_space<vmem>>, vector<16x1xf32>,
    %c0_20 = arith.constant 0 : index
    %c0_21 = arith.constant 0 : index
    %39 = vector.load %arg8[%c0_20, %c0_21] : memref<16x2xi32, #tpu.memory_space<vmem>>, vector<16x1xi32>
    tpu.vector_store %arg8[%c0_20, %c0_21], %37 {strides = array<i32>} : memref<16x2xi32, #tpu.memory_space<vmem>>, vector<16x1xi32>,
    %40 = vector.broadcast %37 : vector<16x1xi32> to vector<16x128xi32>
    %41 = arith.cmpi eq, %25, %40 : vector<16x128xi32>
    %cst_22 = arith.constant -1.000000e+00 : f32
    %42 = vector.broadcast %cst_22 : f32 to vector<16x128xf32>
    %43 = arith.select %41, %42, %29 : vector<16x128xi1>, vector<16x128xf32>
    %cst_23 = arith.constant dense<0xFF800000> : vector<16xf32>
    %44 = vector.multi_reduction <maximumf>, %43, %cst_23 [1] : vector<16x128xf32> to vector<16xf32>
    %45 = vector.shape_cast %44 : vector<16xf32> to vector<16x1xf32>
    %46 = vector.broadcast %45 : vector<16x1xf32> to vector<16x128xf32>
    %47 = arith.cmpf oeq, %43, %46 : vector<16x128xf32>
    %c128_i32_24 = arith.constant 128 : i32
    %48 = vector.broadcast %c128_i32_24 : i32 to vector<16x128xi32>
    %49 = arith.select %47, %25, %48 : vector<16x128xi1>, vector<16x128xi32>
    %cst_25 = arith.constant dense<2147483647> : vector<16xi32>
    %50 = vector.multi_reduction <minsi>, %49, %cst_25 [1] : vector<16x128xi32> to vector<16xi32>
    %51 = vector.shape_cast %50 : vector<16xi32> to vector<16x1xi32>
    %c0_26 = arith.constant 0 : index
    %c1 = arith.constant 1 : index
    %52 = vector.load %arg7[%c0_26, %c1] : memref<16x2xf32, #tpu.memory_space<vmem>>, vector<16x1xf32>
    tpu.vector_store %arg7[%c0_26, %c1], %45 {strides = array<i32>} : memref<16x2xf32, #tpu.memory_space<vmem>>, vector<16x1xf32>,
    %c0_27 = arith.constant 0 : index
    %c1_28 = arith.constant 1 : index
    %53 = vector.load %arg8[%c0_27, %c1_28] : memref<16x2xi32, #tpu.memory_space<vmem>>, vector<16x1xi32>
    tpu.vector_store %arg8[%c0_27, %c1_28], %51 {strides = array<i32>} : memref<16x2xi32, #tpu.memory_space<vmem>>, vector<16x1xi32>,
    return
  }
  func.func @transform_0(%arg0: i32) -> (i32, i32) {
    %c0_i32 = arith.constant 0 : i32
    %c0_i32_0 = arith.constant 0 : i32
    return %arg0, %c0_i32 : i32, i32
  }
  func.func @transform_1(%arg0: i32) -> (i32, i32) {
    %c0_i32 = arith.constant 0 : i32
    %c0_i32_0 = arith.constant 0 : i32
    %c0_i32_1 = arith.constant 0 : i32
    return %c0_i32, %c0_i32_0 : i32, i32
  }
  func.func @transform_2(%arg0: i32) -> (i32, i32) {
    %c0_i32 = arith.constant 0 : i32
    %c0_i32_0 = arith.constant 0 : i32
    %c0_i32_1 = arith.constant 0 : i32
    return %c0_i32, %c0_i32_0 : i32, i32
  }
  func.func @transform_3(%arg0: i32) -> (i32, i32) {
    %c0_i32 = arith.constant 0 : i32
    %c0_i32_0 = arith.constant 0 : i32
    %c0_i32_1 = arith.constant 0 : i32
    return %c0_i32, %c0_i32_0 : i32, i32
  }
  func.func @transform_4(%arg0: i32) -> (i32, i32) {
    %c0_i32 = arith.constant 0 : i32
    %c0_i32_0 = arith.constant 0 : i32
    %c0_i32_1 = arith.constant 0 : i32
    return %c0_i32, %c0_i32_0 : i32, i32
  }
  func.func @transform_5(%arg0: i32) -> (i32, i32) {
    %c0_i32 = arith.constant 0 : i32
    %c0_i32_0 = arith.constant 0 : i32
    return %arg0, %c0_i32 : i32, i32
  }
  func.func @transform_6(%arg0: i32) -> (i32, i32) {
    %c0_i32 = arith.constant 0 : i32
    %c0_i32_0 = arith.constant 0 : i32
    return %arg0, %c0_i32 : i32, i32
  }
  func.func @transform_7(%arg0: i32) -> (i32, i32) {
    %c0_i32 = arith.constant 0 : i32
    %c0_i32_0 = arith.constant 0 : i32
    return %arg0, %c0_i32 : i32, i32
  }
}

module attributes {stable_mosaic.version = 11 : i64} {
  func.func @_dispatch_kernel(%arg0: i32, %arg1: memref<16x2xi32, #tpu.memory_space<vmem>>, %arg2: memref<16x2xi32, #tpu.memory_space<vmem>>, %arg3: memref<16x2xf32, #tpu.memory_space<vmem>>, %arg4: memref<16x2xi32, #tpu.memory_space<vmem>>, %arg5: memref<16x48xf32, #tpu.memory_space<vmem>>, %arg6: memref<16x48xf32, #tpu.memory_space<vmem>>) attributes {dimension_semantics = [#tpu.dimension_semantics<parallel>], iteration_bounds = array<i64: 1>, scalar_prefetch = 0 : i64, scratch_operands = 0 : i64, tpu.core_type = #tpu.core_type<tc>, window_params = [{transform_indices = @transform_0, window_bounds = array<i64: 16, 2>}, {transform_indices = @transform_1, window_bounds = array<i64: 16, 2>}, {transform_indices = @transform_2, window_bounds = array<i64: 16, 2>}, {transform_indices = @transform_3, window_bounds = array<i64: 16, 2>}, {transform_indices = @transform_4, window_bounds = array<i64: 16, 48>}, {transform_indices = @transform_5, window_bounds = array<i64: 16, 48>}]} {
    %0 = tpu.iota {dimensions = array<i32: 1>} : vector<16x48xi32>
    %cst = arith.constant 0.000000e+00 : f32
    %1 = vector.broadcast %cst : f32 to vector<16x48xf32>
    %cst_0 = arith.constant 0.000000e+00 : f32
    %2 = vector.broadcast %cst_0 : f32 to vector<16x48xf32>
    %c0 = arith.constant 0 : index
    %c0_1 = arith.constant 0 : index
    %3 = vector.load %arg1[%c0, %c0_1] : memref<16x2xi32, #tpu.memory_space<vmem>>, vector<16x1xi32>
    %c6_i32 = arith.constant 6 : i32
    %4 = vector.broadcast %c6_i32 : i32 to vector<16x1xi32>
    %5 = arith.muli %3, %4 : vector<16x1xi32>
    %c0_2 = arith.constant 0 : index
    %c0_3 = arith.constant 0 : index
    %6 = vector.load %arg2[%c0_2, %c0_3] : memref<16x2xi32, #tpu.memory_space<vmem>>, vector<16x1xi32>
    %7 = arith.addi %5, %6 : vector<16x1xi32>
    %8 = vector.broadcast %7 : vector<16x1xi32> to vector<16x48xi32>
    %9 = arith.cmpi eq, %0, %8 : vector<16x48xi32>
    %c0_4 = arith.constant 0 : index
    %c0_5 = arith.constant 0 : index
    %10 = vector.load %arg4[%c0_4, %c0_5] : memref<16x2xi32, #tpu.memory_space<vmem>>, vector<16x1xi32>
    %c0_i32 = arith.constant 0 : i32
    %11 = vector.broadcast %c0_i32 : i32 to vector<16x1xi32>
    %12 = arith.cmpi sgt, %10, %11 : vector<16x1xi32>
    %13 = vector.broadcast %12 : vector<16x1xi1> to vector<16x48xi1>
    %14 = arith.andi %9, %13 : vector<16x48xi1>
    %15 = arith.extui %14 : vector<16x48xi1> to vector<16x48xi32>
    %16 = arith.sitofp %15 : vector<16x48xi32> to vector<16x48xf32>
    %17 = arith.addf %1, %16 : vector<16x48xf32>
    %c0_6 = arith.constant 0 : index
    %c0_7 = arith.constant 0 : index
    %18 = vector.load %arg3[%c0_6, %c0_7] : memref<16x2xf32, #tpu.memory_space<vmem>>, vector<16x1xf32>
    %19 = vector.broadcast %18 : vector<16x1xf32> to vector<16x48xf32>
    %20 = arith.mulf %16, %19 : vector<16x48xf32>
    %21 = arith.addf %2, %20 : vector<16x48xf32>
    %c0_8 = arith.constant 0 : index
    %c1 = arith.constant 1 : index
    %22 = vector.load %arg1[%c0_8, %c1] : memref<16x2xi32, #tpu.memory_space<vmem>>, vector<16x1xi32>
    %c6_i32_9 = arith.constant 6 : i32
    %23 = vector.broadcast %c6_i32_9 : i32 to vector<16x1xi32>
    %24 = arith.muli %22, %23 : vector<16x1xi32>
    %c0_10 = arith.constant 0 : index
    %c1_11 = arith.constant 1 : index
    %25 = vector.load %arg2[%c0_10, %c1_11] : memref<16x2xi32, #tpu.memory_space<vmem>>, vector<16x1xi32>
    %26 = arith.addi %24, %25 : vector<16x1xi32>
    %27 = vector.broadcast %26 : vector<16x1xi32> to vector<16x48xi32>
    %28 = arith.cmpi eq, %0, %27 : vector<16x48xi32>
    %c0_12 = arith.constant 0 : index
    %c1_13 = arith.constant 1 : index
    %29 = vector.load %arg4[%c0_12, %c1_13] : memref<16x2xi32, #tpu.memory_space<vmem>>, vector<16x1xi32>
    %c0_i32_14 = arith.constant 0 : i32
    %30 = vector.broadcast %c0_i32_14 : i32 to vector<16x1xi32>
    %31 = arith.cmpi sgt, %29, %30 : vector<16x1xi32>
    %32 = vector.broadcast %31 : vector<16x1xi1> to vector<16x48xi1>
    %33 = arith.andi %28, %32 : vector<16x48xi1>
    %34 = arith.extui %33 : vector<16x48xi1> to vector<16x48xi32>
    %35 = arith.sitofp %34 : vector<16x48xi32> to vector<16x48xf32>
    %36 = arith.addf %17, %35 : vector<16x48xf32>
    %c0_15 = arith.constant 0 : index
    %c1_16 = arith.constant 1 : index
    %37 = vector.load %arg3[%c0_15, %c1_16] : memref<16x2xf32, #tpu.memory_space<vmem>>, vector<16x1xf32>
    %38 = vector.broadcast %37 : vector<16x1xf32> to vector<16x48xf32>
    %39 = arith.mulf %35, %38 : vector<16x48xf32>
    %40 = arith.addf %21, %39 : vector<16x48xf32>
    %c0_17 = arith.constant 0 : index
    %c0_18 = arith.constant 0 : index
    %41 = vector.load %arg5[%c0_17, %c0_18] : memref<16x48xf32, #tpu.memory_space<vmem>>, vector<16x48xf32>
    tpu.vector_store %arg5[%c0_17, %c0_18], %36 {strides = array<i32>} : memref<16x48xf32, #tpu.memory_space<vmem>>, vector<16x48xf32>,
    %c0_19 = arith.constant 0 : index
    %c0_20 = arith.constant 0 : index
    %42 = vector.load %arg6[%c0_19, %c0_20] : memref<16x48xf32, #tpu.memory_space<vmem>>, vector<16x48xf32>
    tpu.vector_store %arg6[%c0_19, %c0_20], %40 {strides = array<i32>} : memref<16x48xf32, #tpu.memory_space<vmem>>, vector<16x48xf32>,
    return
  }
  func.func @transform_0(%arg0: i32) -> (i32, i32) {
    %c0_i32 = arith.constant 0 : i32
    %c0_i32_0 = arith.constant 0 : i32
    return %arg0, %c0_i32 : i32, i32
  }
  func.func @transform_1(%arg0: i32) -> (i32, i32) {
    %c0_i32 = arith.constant 0 : i32
    %c0_i32_0 = arith.constant 0 : i32
    return %arg0, %c0_i32 : i32, i32
  }
  func.func @transform_2(%arg0: i32) -> (i32, i32) {
    %c0_i32 = arith.constant 0 : i32
    %c0_i32_0 = arith.constant 0 : i32
    return %arg0, %c0_i32 : i32, i32
  }
  func.func @transform_3(%arg0: i32) -> (i32, i32) {
    %c0_i32 = arith.constant 0 : i32
    %c0_i32_0 = arith.constant 0 : i32
    return %arg0, %c0_i32 : i32, i32
  }
  func.func @transform_4(%arg0: i32) -> (i32, i32) {
    %c0_i32 = arith.constant 0 : i32
    %c0_i32_0 = arith.constant 0 : i32
    return %arg0, %c0_i32 : i32, i32
  }
  func.func @transform_5(%arg0: i32) -> (i32, i32) {
    %c0_i32 = arith.constant 0 : i32
    %c0_i32_0 = arith.constant 0 : i32
    return %arg0, %c0_i32 : i32, i32
  }
}

</mosaic_0001>

<llo_original>
// kernel: base_router_forward.2
$region0: #{base_router_forward.2}
  #allocation0 [shape = 'u32[]', space=smem, size = 0x4, offset = 0x4, fixed_abs, tag = 'smem constant byte address 0x4 - core index']
  #allocation1 [shape = 'u32[144,128]{1,0:T(1,128)}', space=vmem, size = 0x12000, scoped, tag = 'internal scratch']
  %s0 = inlined_call_operand.vmem [shape: bf16[16,32], index: 0, kind: input, shape index: {}]
  %s1 = inlined_call_operand.vmem [shape: bf16[32,32], index: 1, kind: input, shape index: {}]
  %s2 = inlined_call_operand.vmem [shape: f32[1,32], index: 2, kind: input, shape index: {}]
  %s3 = inlined_call_operand.vmem [shape: bf16[32,128], index: 3, kind: input, shape index: {}]
  %s4 = inlined_call_operand.vmem [shape: f32[1,128], index: 4, kind: input, shape index: {}]
  %s5 = inlined_call_operand.vmem [shape: f32[16,128], index: 5, kind: output, shape index: {0}]
  %s6 = inlined_call_operand.vmem [shape: f32[16,2], index: 6, kind: output, shape index: {1}]
  %s7 = inlined_call_operand.vmem [shape: s32[16,2], index: 7, kind: output, shape index: {2}]
  %8 = xla_tuple %s5, %s6, %s7
  %s9 = sld [smem:[#allocation0]]
  $region46: #{base_router_forward.2} parent=0
    _
  %s11 = ssub.s32 1, %s9
  %s12 = scalar_select 0, %s11, %s9
  // Predicated region
  $region2: #{base_router_forward.2} parent=0 // pred_check
    _
  $region3: #{base_router_forward.2} parent=0 // pred_check_branch
    %14 = sbr.rel (0) target = $region5
  $region4: #{base_router_forward.2} parent=0 // pred_region
    _
  $region5: #{base_router_forward.2} parent=0 // pred_fallthru
    _
  // Predicated region
  $region6: #{base_router_forward.2} parent=0 // pred_check
    _
  $region7: #{base_router_forward.2} parent=0 // pred_check_branch
    %16 = sbr.rel (0) target = $region9
  $region8: #{base_router_forward.2} parent=0 // pred_region
    _
  $region9: #{base_router_forward.2} parent=0 // pred_fallthru
    _
  // Predicated region
  $region10: #{base_router_forward.2} parent=0 // pred_check
    _
  $region11: #{base_router_forward.2} parent=0 // pred_check_branch
    %18 = sbr.rel (0) target = $region13
  $region12: #{base_router_forward.2} parent=0 // pred_region
    _
  $region13: #{base_router_forward.2} parent=0 // pred_fallthru
    _
  // Predicated region
  $region14: #{base_router_forward.2} parent=0 // pred_check
    _
  $region15: #{base_router_forward.2} parent=0 // pred_check_branch
    %20 = sbr.rel (0) target = $region17
  $region16: #{base_router_forward.2} parent=0 // pred_region
    _
  $region17: #{base_router_forward.2} parent=0 // pred_fallthru
    _
  // Predicated region
  $region18: #{base_router_forward.2} parent=0 // pred_check
    _
  $region19: #{base_router_forward.2} parent=0 // pred_check_branch
    %22 = sbr.rel (0) target = $region21
  $region20: #{base_router_forward.2} parent=0 // pred_region
    _
  $region21: #{base_router_forward.2} parent=0 // pred_fallthru
    _
  %v24 = vld [vmem:[%s0] sm:$0xf]
  %v25 = vld [vmem:[%s0 + $0x4] sm:$0xf]
  %v26 = vld [vmem:[%s1] sm:$0xf]
  %v27 = vld [vmem:[%s1 + $0x4] sm:$0xf]
  %v28 = vld [vmem:[%s1 + $0x8] sm:$0xf]
  %v29 = vld [vmem:[%s1 + $0xc] sm:$0xf]
  %v30 = vld [vmem:[%s2] sm:$0x1]
  %v32 = vlaneseq
  %v33 = vshrl.u32 %v32, 7
  %v34 = vsub.s32 0, %v33
  %v35 = vrot.slane %v30, %v34
  %v39 = vunpack.c.l.b16 %v24
  %v40 = vunpack.c.l.b16 %v25
  %v41 = vpack.c.b16 %v40, %v39
  %v46 = vunpack.c.l.b16 %v26
  %v47 = vunpack.c.l.b16 %v27
  %v48 = vunpack.c.l.b16 %v28
  %v49 = vunpack.c.l.b16 %v29
  %v50 = vpack.c.b16 %v47, %v46
  %v51 = vpack.c.b16 %v49, %v48
  %vm54 = vcmask 261120
  %v56 = vsel %vm54, %v41, 0
  %58 = vmatprep.subr.bf16.mxu0 0
  %59 = vmatpush1.bf16.msra.mxu0 %v50
  %60 = vmatprep.subr.bf16.mxu0 0
  %61 = vmatpush1.bf16.msra.mxu0 %v51
  %62 = vmatprep.subr.bf16.mxu0 0
  %63 = vmatpush1.bf16.msra.mxu0 0
  %64 = vmatprep.subr.bf16.mxu0 0
  %65 = vmatpush1.bf16.msra.mxu0 0
  %66 = vmatprep.subr.bf16.mxu0 0
  %67 = vmatpush1.bf16.msra.mxu0 0
  %68 = vmatprep.subr.bf16.mxu0 0
  %69 = vmatpush1.bf16.msra.mxu0 0
  %70 = vmatprep.subr.bf16.mxu0 0
  %71 = vmatpush1.bf16.msra.mxu0 0
  %72 = vmatprep.subr.bf16.mxu0 0
  %73 = vmatpush1.bf16.msra.mxu0 0
  %74 = vmatprep.subr.bf16.mxu0 0
  %75 = vmatpush1.bf16.msra.mxu0 0
  %76 = vmatprep.subr.bf16.mxu0 0
  %77 = vmatpush1.bf16.msra.mxu0 0
  %78 = vmatprep.subr.bf16.mxu0 0
  %79 = vmatpush1.bf16.msra.mxu0 0
  %80 = vmatprep.subr.bf16.mxu0 0
  %81 = vmatpush1.bf16.msra.mxu0 0
  %82 = vmatprep.subr.bf16.mxu0 0
  %83 = vmatpush1.bf16.msra.mxu0 0
  %84 = vmatprep.subr.bf16.mxu0 0
  %85 = vmatpush1.bf16.msra.mxu0 0
  %86 = vmatprep.subr.bf16.mxu0 0
  %87 = vmatpush1.bf16.msra.mxu0 0
  %88 = vmatprep.subr.bf16.mxu0 0
  %89 = vmatpush1.bf16.msra.mxu0 0
  %90 = vmatprep.mubr.bf16.mxu0 0
  %91 = vmatmul.mubr.bf16.gmra.mrb[0].mxu0 %v56
  %v92 = vpop.f32.mrb[0].mxu0
  %v93 = vadd.f32 %v35, %v92
  %v94 = vpop.f32.mrb[0].mxu0
  %v95 = vpop.f32.mrb[0].mxu0
  %v96 = vadd.f32 %v35, %v95
  %v97 = vpop.f32.mrb[0].mxu0
  %98 = vdwg.mxu0
  %v99 = vmax.f32 %v93, 0.0
  %v100 = vmax.f32 %v96, 0.0
  %v101 = vpack.c.bf16 %v100, %v99
  %v102 = vld [vmem:[%s3] sm:$0xf]
  %v103 = vld [vmem:[%s3 + $0x4] sm:$0xf]
  %v104 = vld [vmem:[%s3 + $0x8] sm:$0xf]
  %v105 = vld [vmem:[%s3 + $0xc] sm:$0xf]
  %v106 = vld [vmem:[%s4] sm:$0x1]
  %v108 = vlaneseq
  %v109 = vshrl.u32 %v108, 7
  %v110 = vsub.s32 0, %v109
  %v111 = vrot.slane %v106, %v110
  %v117 = vunpack.c.l.b16 %v102
  %v118 = vunpack.c.l.b16 %v103
  %v119 = vunpack.c.l.b16 %v104
  %v120 = vunpack.c.l.b16 %v105
  %v121 = vpack.c.b16 %v118, %v117
  %v122 = vpack.c.b16 %v120, %v119
  %v126 = vsel %vm54, %v101, 0
  %128 = vmatprep.subr.bf16.mxu0 0
  %129 = vmatpush1.bf16.msra.mxu0 %v121
  %130 = vmatprep.subr.bf16.mxu0 0
  %131 = vmatpush1.bf16.msra.mxu0 %v122
  %132 = vmatprep.subr.bf16.mxu0 0
  %133 = vmatpush1.bf16.msra.mxu0 0
  %134 = vmatprep.subr.bf16.mxu0 0
  %135 = vmatpush1.bf16.msra.mxu0 0
  %136 = vmatprep.subr.bf16.mxu0 0
  %137 = vmatpush1.bf16.msra.mxu0 0
  %138 = vmatprep.subr.bf16.mxu0 0
  %139 = vmatpush1.bf16.msra.mxu0 0
  %140 = vmatprep.subr.bf16.mxu0 0
  %141 = vmatpush1.bf16.msra.mxu0 0
  %142 = vmatprep.subr.bf16.mxu0 0
  %143 = vmatpush1.bf16.msra.mxu0 0
  %144 = vmatprep.subr.bf16.mxu0 0
  %145 = vmatpush1.bf16.msra.mxu0 0
  %146 = vmatprep.subr.bf16.mxu0 0
  %147 = vmatpush1.bf16.msra.mxu0 0
  %148 = vmatprep.subr.bf16.mxu0 0
  %149 = vmatpush1.bf16.msra.mxu0 0
  %150 = vmatprep.subr.bf16.mxu0 0
  %151 = vmatpush1.bf16.msra.mxu0 0
  %152 = vmatprep.subr.bf16.mxu0 0
  %153 = vmatpush1.bf16.msra.mxu0 0
  %154 = vmatprep.subr.bf16.mxu0 0
  %155 = vmatpush1.bf16.msra.mxu0 0
  %156 = vmatprep.subr.bf16.mxu0 0
  %157 = vmatpush1.bf16.msra.mxu0 0
  %158 = vmatprep.subr.bf16.mxu0 0
  %159 = vmatpush1.bf16.msra.mxu0 0
  %160 = vmatprep.mubr.bf16.mxu0 0
  %161 = vmatmul.mubr.bf16.gmra.mrb[0].mxu0 %v126
  %v162 = vpop.f32.mrb[0].mxu0
  %v163 = vadd.f32 %v111, %v162
  %v164 = vpop.f32.mrb[0].mxu0
  %v165 = vpop.f32.mrb[0].mxu0
  %v166 = vadd.f32 %v111, %v165
  %v167 = vpop.f32.mrb[0].mxu0
  %168 = vdwg.mxu0
  %169 = vmax.xlane.f32.xlu0 %v163
  %v170 = vpop.xlane.xlu0 %169
  %171 = vmax.xlane.f32.xlu0 %v166
  %v172 = vpop.xlane.xlu0 %171
  %v173 = vsub.f32 %v163, %v170
  %v174 = vsub.f32 %v166, %v172
  %v175 = vmul.f32 %v173, 1.442695
  %v176 = vpow.pop %v175
  %v177 = vmul.f32 %v174, 1.442695
  %v178 = vpow.pop %v177
  %179 = vadd.xlane.f32.xlu0 %v176
  %v180 = vpop.xlane.xlu0 %179
  %181 = vadd.xlane.f32.xlu0 %v178
  %v182 = vpop.xlane.xlu0 %181
  %v183 = vrcp.pop %v180
  %v184 = vrcp.pop %v182
  %v185 = vmul.f32 %v176, %v183
  %v186 = vmul.f32 %v178, %v184
  %187 = vst [vmem:[%s5] sm:$0xff] %v185
  %188 = vst [vmem:[%s5 + $0x8] sm:$0xff] %v186
  %v189 = vlaneseq
  %v190 = vand.u32 %v189, 127
  %vm191 = vcmp.lt.s32.totalorder %v190, 8
  %v192 = vsel %vm191, %v185, -1.0
  %v193 = vsel %vm191, %v186, -1.0
  %194 = vmax.xlane.f32.xlu0 %v192
  %v195 = vpop.xlane.xlu0 %194
  %196 = vmax.xlane.f32.xlu0 %v193
  %v197 = vpop.xlane.xlu0 %196
  %vm198 = vcmp.eq.f32.partialorder %v192, %v195
  %vm199 = vcmp.eq.f32.partialorder %v193, %v197
  %v200 = vsel %vm198, %v190, 128
  %v201 = vsel %vm199, %v190, 128
  %v202 = vand.u32 %v200, 65535
  %v203 = vshra.s32 %v200, 16
  %v204 = vcvt.s32.f32 %v202
  %v205 = vcvt.s32.f32 %v203
  %206 = vmin.xlane.f32.xlu0 %v205
  %v207 = vpop.xlane.xlu0 %206
  %vm208 = vcmp.eq.f32.partialorder %v205, %v207
  %v209 = vsel %vm208, %v204, inf
  %210 = vmin.xlane.f32.xlu0 %v209
  %v211 = vpop.xlane.xlu0 %210
  %v212 = vcvt.f32.s32 %v211
  %v213 = vcvt.f32.s32 %v207
  %v214 = vshll.u32 %v213, 16
  %v215 = vadd.s32 %v214, %v212
  %v216 = vand.u32 %v201, 65535
  %v217 = vshra.s32 %v201, 16
  %v218 = vcvt.s32.f32 %v216
  %v219 = vcvt.s32.f32 %v217
  %220 = vmin.xlane.f32.xlu0 %v219
  %v221 = vpop.xlane.xlu0 %220
  %vm222 = vcmp.eq.f32.partialorder %v219, %v221
  %v223 = vsel %vm222, %v218, inf
  %224 = vmin.xlane.f32.xlu0 %v223
  %v225 = vpop.xlane.xlu0 %224
  %v226 = vcvt.f32.s32 %v225
  %v227 = vcvt.f32.s32 %v221
  %v228 = vshll.u32 %v227, 16
  %v229 = vadd.s32 %v228, %v226
  %vm230 = vcmask 7168
  %231 = vst.msk [vmem:[%s6] sm:$0xff] %vm230, %v195
  %232 = vst.msk [vmem:[%s6 + $0x8] sm:$0xff] %vm230, %v197
  %233 = vst.msk [vmem:[%s7] sm:$0xff] %vm230, %v215
  %234 = vst.msk [vmem:[%s7 + $0x8] sm:$0xff] %vm230, %v229
  %vm235 = vcmp.eq.s32.totalorder %v190, %v215
  %vm236 = vcmp.eq.s32.totalorder %v190, %v229
  %v237 = vsel %vm235, -1.0, %v192
  %v238 = vsel %vm236, -1.0, %v193
  %239 = vmax.xlane.f32.xlu0 %v237
  %v240 = vpop.xlane.xlu0 %239
  %241 = vmax.xlane.f32.xlu0 %v238
  %v242 = vpop.xlane.xlu0 %241
  %vm243 = vcmp.eq.f32.partialorder %v237, %v240
  %vm244 = vcmp.eq.f32.partialorder %v238, %v242
  %v245 = vsel %vm243, %v190, 128
  %v246 = vsel %vm244, %v190, 128
  %v247 = vand.u32 %v245, 65535
  %v248 = vshra.s32 %v245, 16
  %v249 = vcvt.s32.f32 %v247
  %v250 = vcvt.s32.f32 %v248
  %251 = vmin.xlane.f32.xlu0 %v250
  %v252 = vpop.xlane.xlu0 %251
  %vm253 = vcmp.eq.f32.partialorder %v250, %v252
  %v254 = vsel %vm253, %v249, inf
  %255 = vmin.xlane.f32.xlu0 %v254
  %v256 = vpop.xlane.xlu0 %255
  %v257 = vcvt.f32.s32 %v256
  %v258 = vcvt.f32.s32 %v252
  %v259 = vshll.u32 %v258, 16
  %v260 = vadd.s32 %v259, %v257
  %v261 = vand.u32 %v246, 65535
  %v262 = vshra.s32 %v246, 16
  %v263 = vcvt.s32.f32 %v261
  %v264 = vcvt.s32.f32 %v262
  %265 = vmin.xlane.f32.xlu0 %v264
  %v266 = vpop.xlane.xlu0 %265
  %vm267 = vcmp.eq.f32.partialorder %v264, %v266
  %v268 = vsel %vm267, %v263, inf
  %269 = vmin.xlane.f32.xlu0 %v268
  %v270 = vpop.xlane.xlu0 %269
  %v271 = vcvt.f32.s32 %v270
  %v272 = vcvt.f32.s32 %v266
  %v273 = vshll.u32 %v272, 16
  %v274 = vadd.s32 %v273, %v271
  %vm275 = vcmask 15368
  %276 = vst.msk [vmem:[%s6] sm:$0xff] %vm275, %v240
  %277 = vst.msk [vmem:[%s6 + $0x8] sm:$0xff] %vm275, %v242
  %278 = vst.msk [vmem:[%s7] sm:$0xff] %vm275, %v260
  %279 = vst.msk [vmem:[%s7 + $0x8] sm:$0xff] %vm275, %v274
  // Predicated region
  $region22: #{base_router_forward.2} parent=0 // pred_check
    _
  $region23: #{base_router_forward.2} parent=0 // pred_check_branch
    %281 = sbr.rel (0) target = $region25
  $region24: #{base_router_forward.2} parent=0 // pred_region
    _
  $region25: #{base_router_forward.2} parent=0 // pred_fallthru
    _
  // Predicated region
  $region26: #{base_router_forward.2} parent=0 // pred_check
    _
  $region27: #{base_router_forward.2} parent=0 // pred_check_branch
    %283 = sbr.rel (0) target = $region29
  $region28: #{base_router_forward.2} parent=0 // pred_region
    _
  $region29: #{base_router_forward.2} parent=0 // pred_fallthru
    _
  // Predicated region
  $region30: #{base_router_forward.2} parent=0 // pred_check
    _
  $region31: #{base_router_forward.2} parent=0 // pred_check_branch
    %285 = sbr.rel (0) target = $region33
  $region32: #{base_router_forward.2} parent=0 // pred_region
    _
  $region33: #{base_router_forward.2} parent=0 // pred_fallthru
    _
  // Predicated region
  $region34: #{base_router_forward.2} parent=0 // pred_check
    _
  $region35: #{base_router_forward.2} parent=0 // pred_check_branch
    %287 = sbr.rel (0) target = $region37
  $region36: #{base_router_forward.2} parent=0 // pred_region
    _
  $region37: #{base_router_forward.2} parent=0 // pred_fallthru
    _
  // Predicated region
  $region38: #{base_router_forward.2} parent=0 // pred_check
    _
  $region39: #{base_router_forward.2} parent=0 // pred_check_branch
    %289 = sbr.rel (0) target = $region41
  $region40: #{base_router_forward.2} parent=0 // pred_region
    _
  $region41: #{base_router_forward.2} parent=0 // pred_fallthru
    _
  // Predicated region
  $region42: #{base_router_forward.2} parent=0 // pred_check
    _
  $region43: #{base_router_forward.2} parent=0 // pred_check_branch
    %291 = sbr.rel (0) target = $region45
  $region44: #{base_router_forward.2} parent=0 // pred_region
    _
  $region45: #{base_router_forward.2} parent=0 // pred_fallthru
    _

// kernel: base_router_forward.3
$region0: #{base_router_forward.3}
  #allocation0 [shape = 'u32[]', space=smem, size = 0x4, offset = 0x4, fixed_abs, tag = 'smem constant byte address 0x4 - core index']
  #allocation1 [shape = 'u32[144,128]{1,0:T(1,128)}', space=vmem, size = 0x12000, scoped, tag = 'internal scratch']
  %s0 = inlined_call_operand.vmem [shape: s32[16,2], index: 0, kind: input, shape index: {}]
  %s1 = inlined_call_operand.vmem [shape: s32[16,2], index: 1, kind: input, shape index: {}]
  %s2 = inlined_call_operand.vmem [shape: f32[16,2], index: 2, kind: input, shape index: {}]
  %s3 = inlined_call_operand.vmem [shape: s32[16,2], index: 3, kind: input, shape index: {}]
  %s4 = inlined_call_operand.vmem [shape: f32[16,48], index: 4, kind: output, shape index: {0}]
  %s5 = inlined_call_operand.vmem [shape: f32[16,48], index: 5, kind: output, shape index: {1}]
  %6 = xla_tuple %s4, %s5
  %s7 = sld [smem:[#allocation0]]
  $region34: #{base_router_forward.3} parent=0
    _
  %s9 = ssub.s32 1, %s7
  %s10 = scalar_select 0, %s9, %s7
  // Predicated region
  $region2: #{base_router_forward.3} parent=0 // pred_check
    _
  $region3: #{base_router_forward.3} parent=0 // pred_check_branch
    %12 = sbr.rel (0) target = $region5
  $region4: #{base_router_forward.3} parent=0 // pred_region
    _
  $region5: #{base_router_forward.3} parent=0 // pred_fallthru
    _
  // Predicated region
  $region6: #{base_router_forward.3} parent=0 // pred_check
    _
  $region7: #{base_router_forward.3} parent=0 // pred_check_branch
    %14 = sbr.rel (0) target = $region9
  $region8: #{base_router_forward.3} parent=0 // pred_region
    _
  $region9: #{base_router_forward.3} parent=0 // pred_fallthru
    _
  // Predicated region
  $region10: #{base_router_forward.3} parent=0 // pred_check
    _
  $region11: #{base_router_forward.3} parent=0 // pred_check_branch
    %16 = sbr.rel (0) target = $region13
  $region12: #{base_router_forward.3} parent=0 // pred_region
    _
  $region13: #{base_router_forward.3} parent=0 // pred_fallthru
    _
  // Predicated region
  $region14: #{base_router_forward.3} parent=0 // pred_check
    _
  $region15: #{base_router_forward.3} parent=0 // pred_check_branch
    %18 = sbr.rel (0) target = $region17
  $region16: #{base_router_forward.3} parent=0 // pred_region
    _
  $region17: #{base_router_forward.3} parent=0 // pred_fallthru
    _
  %v19 = vlaneseq
  %v20 = vand.u32 %v19, 127
  %v21 = vld [vmem:[%s0] sm:$0xff]
  %v22 = vld [vmem:[%s0 + $0x8] sm:$0xff]
  %v23 = vmul.u32 %v21, 6
  %v24 = vmul.u32 %v22, 6
  %v25 = vld [vmem:[%s1] sm:$0xff]
  %v26 = vld [vmem:[%s1 + $0x8] sm:$0xff]
  %v27 = vadd.s32 %v23, %v25
  %v28 = vadd.s32 %v24, %v26
  %29 = vset.pattern.permute.xlu0 0
  %30 = vperm.xlu0 %29, %v27
  %v31 = vpop.permute.xlu0 %30
  %32 = vset.pattern.permute.xlu0 0
  %33 = vperm.xlu0 %32, %v28
  %v34 = vpop.permute.xlu0 %33
  %vm35 = vcmp.eq.s32.totalorder %v20, %v31
  %vm36 = vcmp.eq.s32.totalorder %v20, %v34
  %v37 = vld [vmem:[%s3] sm:$0xff]
  %v38 = vld [vmem:[%s3 + $0x8] sm:$0xff]
  %vm39 = vcmp.gt.s32.totalorder %v37, 0
  %vm40 = vcmp.gt.s32.totalorder %v38, 0
  %v41 = vsel %vm39, 1, 0
  %v42 = vsel %vm40, 1, 0
  %43 = vset.pattern.permute.xlu0 0
  %44 = vperm.xlu0 %43, %v41
  %v45 = vpop.permute.xlu0 %44
  %46 = vset.pattern.permute.xlu0 0
  %47 = vperm.xlu0 %46, %v42
  %v48 = vpop.permute.xlu0 %47
  %vm49 = vcmp.eq.s32.totalorder %v45, 1
  %vm50 = vcmp.eq.s32.totalorder %v48, 1
  %vm51 = vmand %vm35, %vm49
  %vm52 = vmand %vm36, %vm50
  %v53 = vsel %vm51, 1, 0
  %v54 = vsel %vm52, 1, 0
  %v55 = vcvt.s32.f32 %v53
  %v56 = vcvt.s32.f32 %v54
  %v57 = vadd.f32 %v55, 0.0
  %v58 = vadd.f32 %v56, 0.0
  %v59 = vld [vmem:[%s2] sm:$0xff]
  %v60 = vld [vmem:[%s2 + $0x8] sm:$0xff]
  %62 = vset.pattern.permute.xlu0 0
  %63 = vperm.xlu0 %62, %v59
  %v64 = vpop.permute.xlu0 %63
  %67 = vset.pattern.permute.xlu0 0
  %68 = vperm.xlu0 %67, %v60
  %v69 = vpop.permute.xlu0 %68
  %v71 = vmul.f32 %v55, %v64
  %v72 = vmul.f32 %v56, %v69
  %v73 = vadd.f32 %v71, 0.0
  %v74 = vadd.f32 %v72, 0.0
  %75 = vset.pattern.permute.xlu0 1
  %76 = vperm.xlu0 %75, %v27
  %v77 = vpop.permute.xlu0 %76
  %78 = vset.pattern.permute.xlu0 1
  %79 = vperm.xlu0 %78, %v28
  %v80 = vpop.permute.xlu0 %79
  %vm81 = vcmp.eq.s32.totalorder %v20, %v77
  %vm82 = vcmp.eq.s32.totalorder %v20, %v80
  %83 = vset.pattern.permute.xlu0 1
  %84 = vperm.xlu0 %83, %v41
  %v85 = vpop.permute.xlu0 %84
  %86 = vset.pattern.permute.xlu0 1
  %87 = vperm.xlu0 %86, %v42
  %v88 = vpop.permute.xlu0 %87
  %vm89 = vcmp.eq.s32.totalorder %v85, 1
  %vm90 = vcmp.eq.s32.totalorder %v88, 1
  %vm91 = vmand %vm81, %vm89
  %vm92 = vmand %vm82, %vm90
  %v93 = vsel %vm91, 1, 0
  %v94 = vsel %vm92, 1, 0
  %v95 = vcvt.s32.f32 %v93
  %v96 = vcvt.s32.f32 %v94
  %v97 = vadd.f32 %v57, %v95
  %v98 = vadd.f32 %v58, %v96
  %99 = vset.pattern.permute.xlu0 1
  %100 = vperm.xlu0 %99, %v59
  %v101 = vpop.permute.xlu0 %100
  %103 = vset.pattern.permute.xlu0 1
  %104 = vperm.xlu0 %103, %v60
  %v105 = vpop.permute.xlu0 %104
  %v107 = vmul.f32 %v95, %v101
  %v108 = vmul.f32 %v96, %v105
  %v109 = vadd.f32 %v73, %v107
  %v110 = vadd.f32 %v74, %v108
  %vm111 = vcmask 392192
  %112 = vst.msk [vmem:[%s4] sm:$0xff] %vm111, %v97
  %113 = vst.msk [vmem:[%s4 + $0x8] sm:$0xff] %vm111, %v98
  %114 = vst.msk [vmem:[%s5] sm:$0xff] %vm111, %v109
  %115 = vst.msk [vmem:[%s5 + $0x8] sm:$0xff] %vm111, %v110
  // Predicated region
  $region18: #{base_router_forward.3} parent=0 // pred_check
    _
  $region19: #{base_router_forward.3} parent=0 // pred_check_branch
    %117 = sbr.rel (0) target = $region21
  $region20: #{base_router_forward.3} parent=0 // pred_region
    _
  $region21: #{base_router_forward.3} parent=0 // pred_fallthru
    _
  // Predicated region
  $region22: #{base_router_forward.3} parent=0 // pred_check
    _
  $region23: #{base_router_forward.3} parent=0 // pred_check_branch
    %119 = sbr.rel (0) target = $region25
  $region24: #{base_router_forward.3} parent=0 // pred_region
    _
  $region25: #{base_router_forward.3} parent=0 // pred_fallthru
    _
  // Predicated region
  $region26: #{base_router_forward.3} parent=0 // pred_check
    _
  $region27: #{base_router_forward.3} parent=0 // pred_check_branch
    %121 = sbr.rel (0) target = $region29
  $region28: #{base_router_forward.3} parent=0 // pred_region
    _
  $region29: #{base_router_forward.3} parent=0 // pred_fallthru
    _
  // Predicated region
  $region30: #{base_router_forward.3} parent=0 // pred_check
    _
  $region31: #{base_router_forward.3} parent=0 // pred_check_branch
    %123 = sbr.rel (0) target = $region33
  $region32: #{base_router_forward.3} parent=0 // pred_region
    _
  $region33: #{base_router_forward.3} parent=0 // pred_fallthru
    _

</llo_original>
